<compile_context>
chip_gen: v5e
topology: v5e:2x2
jax: 0.10.0
libtpu: 0.0.40
codegen_flags: <defaults>
</compile_context>

<pallas_src>
import jax
import jax.numpy as jnp
from jax.experimental import pallas as pl
from jax.experimental.pallas import tpu as pltpu

LANES = 128                 # TPU lane width; pad the 2-class projection for the MXU.
SUBLANES = 8                # f32 sublane tile.
MIN_FUSED_ROW_BYTES = 512   # below this the fused [CLS] DMA bursts get too small.


def _round_up(x, m):
    return (x + m - 1) // m * m


def nsp_kernel(x_ref, w1_ref, b1_ref, w2_ref, b2_ref, o_ref):
    # x_ref : (tb, H)      [CLS] hidden states for this batch tile
    # w1_ref: (H, H)       pooler weight, [in, out]
    # b1_ref: (1, H)       pooler bias (f32)
    # w2_ref: (H, 128)     fc weight, [in, out], zero-padded to 128 lanes
    # b2_ref: (1, 128)     fc bias, zero-padded (f32)
    # o_ref : (tb, 2)      logits; only the 2 real classes leave the kernel
    x = x_ref[...]
    pooled = jnp.tanh(
        jnp.dot(x, w1_ref[...], preferred_element_type=jnp.float32)
        + b1_ref[...]
    )
    logits = (
        jnp.dot(pooled.astype(w2_ref.dtype), w2_ref[...],
                preferred_element_type=jnp.float32)
        + b2_ref[...]
    )
    o_ref[...] = logits[:, :2].astype(o_ref.dtype)


def prepare_nsp_params(w1, b1, w2, b2, *, compute_dtype=jnp.bfloat16):
    """One-time weight prep (hoisted out of the hot path).

    w1: [H, H] and w2: [H, 2] must already be [in, out] (i.e. PyTorch Linear
    weights transposed).  Pads the fc weight/bias to 128 lanes for a full MXU
    tile; biases stay f32 (accumulation dtype).
    """
    H = w1.shape[0]
    w1p = w1.astype(compute_dtype)
    b1p = b1.astype(jnp.float32).reshape(1, H)
    w2p = jnp.zeros((H, LANES), dtype=compute_dtype).at[:, :2].set(
        w2.astype(compute_dtype))
    b2p = jnp.zeros((1, LANES), dtype=jnp.float32).at[:, :2].set(
        b2.astype(jnp.float32).reshape(1, 2))
    return w1p, b1p, w2p, b2p


def _pick_batch_tile(B, block_b, itemsize):
    """Largest aligned tile <= block_b, capped so grid_b >= 2 when B allows
    (so the "parallel" batch axis shards across both v7x TensorCores)."""
    sub = max(SUBLANES, 32 // itemsize)        # 8 rows f32, 16 bf16, 32 int8/fp8
    tb = min(block_b, B)
    if B >= 2 * sub:
        # Align the cap to 128 when B is large enough to fill the MXU M dim.
        align = LANES if B >= 2 * LANES else sub
        tb = min(tb, _round_up(pl.cdiv(B, 2), align))
    if tb != B:
        tb = _round_up(tb, sub)                # sublane alignment for partial blocks
    return tb


def next_sentence_prediction(sequence_output, w1p, b1p, w2p, b2p, *,
                             block_b=2048):
    """BERT NSP head.  sequence_output: [B, S, H]; params from
    prepare_nsp_params().  Returns [B, 2] float32 logits."""
    B, S, H = sequence_output.shape
    assert w1p.shape == (H, H) and w2p.shape == (H, LANES)

    itemsize = sequence_output.dtype.itemsize
    tb = _pick_batch_tile(B, block_b, itemsize)
    grid_b = pl.cdiv(B, tb)

    # ---- Fuse the [CLS] extraction into the kernel's input DMA --------------
    # Contiguous (free) reshape to (B, S*H); a (tb, H) window at column 0 is
    # exactly the first token of every batch row.  Needs lane-aligned H and a
    # per-row burst of >= 512 B, otherwise fall back to an external slice.
    if S == 1 or (H % LANES == 0 and H * itemsize >= MIN_FUSED_ROW_BYTES):
        x_in = sequence_output.reshape(B, S * H)
    else:
        x_in = sequence_output[:, 0, :]          # [B, H] fallback
    x_spec = pl.BlockSpec((tb, H), lambda i: (i, 0))

    # Constant block index + single buffering: weights/biases are DMA'd once
    # and stay VMEM-resident across all batch tiles at 1x footprint.
    def resident(shape):
        return pl.BlockSpec(shape, lambda i: (0, 0),
                            pipeline_mode=pl.Buffered(1))

    w_itemsize = w1p.dtype.itemsize
    flops = 2 * B * H * H + 2 * B * H * LANES
    bytes_accessed = (
        B * H * itemsize                        # [CLS] activations
        + (H * H + H * LANES) * w_itemsize      # weights (fetched once)
        + (H + LANES) * 4                       # biases
        + B * 2 * 4                             # logits
    )
    cost = pl.CostEstimate(flops=int(flops), transcendentals=int(B * H),
                           bytes_accessed=int(bytes_accessed))

    # VMEM budget: actual footprint + 2x headroom, capped under v7x's 64 MiB.
    vmem_need = (
        2 * tb * H * itemsize                   # double-buffered activation tile
        + (H * H + H * LANES) * w_itemsize      # single-buffered weights
        + (H + LANES) * 4                       # biases
        + 2 * tb * LANES * 4                    # output tile (lane-padded in VMEM)
    )
    vmem_limit = int(min(max(2 * vmem_need, 16 * 1024 * 1024),
                         48 * 1024 * 1024))

    # TODO(synk): add a K-tiled path (extra "arbitrary" grid axis + f32 VMEM
    # accumulator) for very large H f32 on v7x, where a full (H, H) W1 block
    # exceeds the 64 MiB VMEM; bf16 weights cover BERT-scale hidden sizes.

    return pl.pallas_call(
        nsp_kernel,
        out_shape=jax.ShapeDtypeStruct((B, 2), jnp.float32),
        grid_spec=pl.GridSpec(
            grid=(grid_b,),
            in_specs=[
                x_spec,
                resident((H, H)),
                resident((1, H)),
                resident((H, LANES)),
                resident((1, LANES)),
            ],
            out_specs=pl.BlockSpec((tb, 2), lambda i: (i, 0)),
        ),
        compiler_params=pltpu.CompilerParams(
            # Batch tiles are independent -> shard across TensorCores (v7x).
            dimension_semantics=("parallel",),
            vmem_limit_bytes=vmem_limit,
        ),
        cost_estimate=cost,
    )(x_in, w1p, b1p, w2p, b2p)


def reference(sequence_output, w1, b1, w2, b2):
    x = sequence_output[:, 0, :].astype(jnp.float32)
    pooled = jnp.tanh(x @ w1 + b1)
    return pooled @ w2 + b2


if __name__ == "__main__":
    # Small shapes consistent with the module: batch=16, seq=8, hidden=128
    # (lane-aligned so the fused [CLS]-extraction DMA path is exercised).
    B, S, H = 16, 8, 128

    key = jax.random.PRNGKey(0)
    k_x, k_w1, k_b1, k_w2, k_b2 = jax.random.split(key, 5)

    # PyTorch nn.Linear stores W as [out, in]; weights here are pre-transposed
    # to [in, out] so the kernel computes x @ W directly on the MXU.
    sequence_output = jax.random.normal(k_x, (B, S, H), dtype=jnp.float32)
    w1 = jax.random.normal(k_w1, (H, H), dtype=jnp.float32) * 0.02
    b1 = jax.random.normal(k_b1, (H,), dtype=jnp.float32) * 0.02
    w2 = jax.random.normal(k_w2, (H, 2), dtype=jnp.float32) * 0.02
    b2 = jax.random.normal(k_b2, (2,), dtype=jnp.float32) * 0.02

    ref = reference(sequence_output, w1, b1, w2, b2)

    # f32 path: tight tolerance; exercises the fused [CLS] DMA and a 2-tile
    # grid (tile is capped so both v7x TensorCores would get work).
    p32 = prepare_nsp_params(w1, b1, w2, b2, compute_dtype=jnp.float32)
    out32 = jax.block_until_ready(
        next_sentence_prediction(sequence_output, *p32))
    assert out32.shape == (B, 2)
    assert jnp.allclose(out32, ref, atol=1e-4, rtol=1e-4), (
        f"f32 max abs err {jnp.max(jnp.abs(out32 - ref))}")

    # bf16 path: bandwidth-optimized (halved activation/weight DMA), f32
    # accumulation in-kernel; looser tolerance vs. the f32 reference.
    pbf = prepare_nsp_params(w1, b1, w2, b2, compute_dtype=jnp.bfloat16)
    outbf = jax.block_until_ready(
        next_sentence_prediction(sequence_output.astype(jnp.bfloat16), *pbf))
    assert outbf.shape == (B, 2)
    assert jnp.allclose(outbf, ref, atol=3e-2, rtol=3e-2), (
        f"bf16 max abs err {jnp.max(jnp.abs(outbf - ref))}")

    print("KERNEL_OK")
</pallas_src>

<mosaic_0001>
module attributes {stable_mosaic.version = 11 : i64} {
  func.func @nsp_kernel(%arg0: i32, %arg1: memref<8x128xf32, #tpu.memory_space<vmem>>, %arg2: memref<128x128xf32, #tpu.memory_space<vmem>>, %arg3: memref<1x128xf32, #tpu.memory_space<vmem>>, %arg4: memref<128x128xf32, #tpu.memory_space<vmem>>, %arg5: memref<1x128xf32, #tpu.memory_space<vmem>>, %arg6: memref<8x2xf32, #tpu.memory_space<vmem>>) attributes {dimension_semantics = [#tpu.dimension_semantics<parallel>], iteration_bounds = array<i64: 2>, scalar_prefetch = 0 : i64, scratch_operands = 0 : i64, tpu.core_type = #tpu.core_type<tc>, window_params = [{transform_indices = @transform_0, window_bounds = array<i64: 8, 128>}, {pipeline_mode = #tpu.pipeline_mode<synchronous>, transform_indices = @transform_1, window_bounds = array<i64: 128, 128>}, {pipeline_mode = #tpu.pipeline_mode<synchronous>, transform_indices = @transform_2, window_bounds = array<i64: 1, 128>}, {pipeline_mode = #tpu.pipeline_mode<synchronous>, transform_indices = @transform_3, window_bounds = array<i64: 128, 128>}, {pipeline_mode = #tpu.pipeline_mode<synchronous>, transform_indices = @transform_4, window_bounds = array<i64: 1, 128>}, {transform_indices = @transform_5, window_bounds = array<i64: 8, 2>}]} {
    %c0 = arith.constant 0 : index
    %c0_0 = arith.constant 0 : index
    %0 = vector.load %arg1[%c0, %c0_0] : memref<8x128xf32, #tpu.memory_space<vmem>>, vector<8x128xf32>
    %c0_1 = arith.constant 0 : index
    %c0_2 = arith.constant 0 : index
    %1 = vector.load %arg2[%c0_1, %c0_2] : memref<128x128xf32, #tpu.memory_space<vmem>>, vector<128x128xf32>
    %cst = arith.constant dense<0.000000e+00> : vector<8x128xf32>
    %2 = tpu.matmul %0, %1, %cst {dimension_numbers = #tpu.dot_dimension_numbers<[1], [0], [0], [1], [0, 0, 1, 1], [], []>} : vector<8x128xf32>, vector<128x128xf32>, vector<8x128xf32> -> vector<8x128xf32>
    %c0_3 = arith.constant 0 : index
    %c0_4 = arith.constant 0 : index
    %3 = vector.load %arg3[%c0_3, %c0_4] : memref<1x128xf32, #tpu.memory_space<vmem>>, vector<1x128xf32>
    %4 = vector.broadcast %3 : vector<1x128xf32> to vector<8x128xf32>
    %5 = arith.addf %2, %4 : vector<8x128xf32>
    %6 = math.tanh %5 : vector<8x128xf32>
    %c0_5 = arith.constant 0 : index
    %c0_6 = arith.constant 0 : index
    %7 = vector.load %arg4[%c0_5, %c0_6] : memref<128x128xf32, #tpu.memory_space<vmem>>, vector<128x128xf32>
    %cst_7 = arith.constant dense<0.000000e+00> : vector<8x128xf32>
    %8 = tpu.matmul %6, %7, %cst_7 {dimension_numbers = #tpu.dot_dimension_numbers<[1], [0], [0], [1], [0, 0, 1, 1], [], []>} : vector<8x128xf32>, vector<128x128xf32>, vector<8x128xf32> -> vector<8x128xf32>
    %c0_8 = arith.constant 0 : index
    %c0_9 = arith.constant 0 : index
    %9 = vector.load %arg5[%c0_8, %c0_9] : memref<1x128xf32, #tpu.memory_space<vmem>>, vector<1x128xf32>
    %10 = vector.broadcast %9 : vector<1x128xf32> to vector<8x128xf32>
    %11 = arith.addf %8, %10 : vector<8x128xf32>
    %12 = vector.extract_strided_slice %11 {offsets = [0, 0], sizes = [8, 2], strides = [1, 1]} : vector<8x128xf32> to vector<8x2xf32>
    %c0_10 = arith.constant 0 : index
    %c0_11 = arith.constant 0 : index
    %13 = vector.load %arg6[%c0_10, %c0_11] : memref<8x2xf32, #tpu.memory_space<vmem>>, vector<8x2xf32>
    tpu.vector_store %arg6[%c0_10, %c0_11], %12 {strides = array<i32>} : memref<8x2xf32, #tpu.memory_space<vmem>>, vector<8x2xf32>,
    return
  }
  func.func @transform_0(%arg0: i32) -> (i32, i32) {
    %c0_i32 = arith.constant 0 : i32
    %c0_i32_0 = arith.constant 0 : i32
    return %arg0, %c0_i32 : i32, i32
  }
  func.func @transform_1(%arg0: i32) -> (i32, i32) {
    %c0_i32 = arith.constant 0 : i32
    %c0_i32_0 = arith.constant 0 : i32
    %c0_i32_1 = arith.constant 0 : i32
    return %c0_i32, %c0_i32_0 : i32, i32
  }
  func.func @transform_2(%arg0: i32) -> (i32, i32) {
    %c0_i32 = arith.constant 0 : i32
    %c0_i32_0 = arith.constant 0 : i32
    %c0_i32_1 = arith.constant 0 : i32
    return %c0_i32, %c0_i32_0 : i32, i32
  }
  func.func @transform_3(%arg0: i32) -> (i32, i32) {
    %c0_i32 = arith.constant 0 : i32
    %c0_i32_0 = arith.constant 0 : i32
    %c0_i32_1 = arith.constant 0 : i32
    return %c0_i32, %c0_i32_0 : i32, i32
  }
  func.func @transform_4(%arg0: i32) -> (i32, i32) {
    %c0_i32 = arith.constant 0 : i32
    %c0_i32_0 = arith.constant 0 : i32
    %c0_i32_1 = arith.constant 0 : i32
    return %c0_i32, %c0_i32_0 : i32, i32
  }
  func.func @transform_5(%arg0: i32) -> (i32, i32) {
    %c0_i32 = arith.constant 0 : i32
    %c0_i32_0 = arith.constant 0 : i32
    return %arg0, %c0_i32 : i32, i32
  }
}

</mosaic_0001>

<llo_original>
// kernel: tpu_custom_call.1
$region0: #{tpu_custom_call.1}
  #allocation0 [shape = 'u32[]', space=smem, size = 0x4, offset = 0x4, fixed_abs, tag = 'smem constant byte address 0x4 - core index']
  #allocation1 [shape = 'u32[72,128]{1,0:T(1,128)}', space=vmem, size = 0x9000, scoped, tag = 'internal scratch']
  %s0 = inlined_call_operand.hbm [shape: f32[16,1024], index: 0, kind: input, shape index: {}]
  %s1 = inlined_call_operand.hbm [shape: f32[128,128], index: 1, kind: input, shape index: {}]
  %s2 = inlined_call_operand.vmem [shape: f32[1,128], index: 2, kind: input, shape index: {}]
  %s3 = inlined_call_operand.hbm [shape: f32[128,128], index: 3, kind: input, shape index: {}]
  %s4 = inlined_call_operand.vmem [shape: f32[1,128], index: 4, kind: input, shape index: {}]
  %s5 = inlined_call_operand.vmem [shape: f32[16,2], index: 5, kind: output, shape index: {}]
  %s6 = sld [smem:[#allocation0]]
  $region65: #{tpu_custom_call.1} parent=0
    _
  %s8 = ssub.s32 1, %s6
  %s9 = scalar_select 0, %s8, %s6
  $region1: #{tpu_custom_call.1} parent=0
    #allocation2 [shape = 'u8[8192]{0}', space=vmem, size = 0x2000, scoped, tag = 'input window, operand 0']
    #allocation3 [shape = 's32[2]{0}', space=sflag, size = 0x8, scoped, tag = 'scoped memory for tpu_custom_call.1']
    #allocation4 [shape = 'u8[65536]{0}', space=vmem, size = 0x10000, scoped, tag = 'input window, operand 1, single buffered']
    #allocation5 [shape = 's32[1]{0}', space=sflag, size = 0x4, scoped, tag = 'scoped memory for tpu_custom_call.1']
    #allocation6 [shape = 'u8[65536]{0}', space=vmem, size = 0x10000, scoped, tag = 'input window, operand 3, single buffered']
    %10 = vsyncpa [#allocation3], 0
    %s11 = scalar_lea.sflag [#allocation3], 1
    %12 = vsyncpa %s11, 0
    %13 = vsyncpa [#allocation5], 0
    loop: start=0, step=1, limit=4
    $region2: #{tpu_custom_call.1} parent=1 // loop_pre_header
      _
    $region3: #{tpu_custom_call.1} parent=1 // loop_header
      %s15 = sphi 0, %s19
      %p16 = scmp.ge.s32.totalorder %s15, 4
      %s25 = sphi 0, %s27
      %s28 = sphi 0, %s25
      %s29 = sphi 0, %s28
      %s45 = sphi 0, %s29
      %s49 = sphi 0, %s49
      %s51 = sphi 0, %s49
      %s52 = sphi 0, %s51
      %s66 = sphi 0, %s52
      %s70 = sphi 0, %s70
      %s72 = sphi 0, %s70
      %s73 = sphi 0, %s72
      %s87 = sphi 0, %s73
      %s91 = sphi 0, %s91
      %s93 = sphi 0, %s91
      %s94 = sphi 0, %s93
      %s108 = sphi 0, %s94
      %s112 = sphi 0, %s112
      %s114 = sphi 0, %s112
      %s115 = sphi 0, %s114
      %s129 = sphi 0, %s115
      %s135 = sphi 0, %s137
      %s138 = sphi 0, %s135
      %s139 = sphi 0, %s138
      %s155 = sphi 0, %s139
    $region4: #{tpu_custom_call.1} parent=1 // loop_header_branch
      %18 = sbr.rel (%p16) target = $region8
    $region5: #{tpu_custom_call.1} parent=1 // loop_body
      %s20 = ssub.s32 %s15, 1
      %s21 = ssub.s32 %s15, 2
      %s22 = sadd.s32 %s15, 1
      %s23 = ssub.s32 %s15, %s22
      %p24 = scmp.eq.s32.totalorder %s23, 0
      %s26 = sadd.s32 %s25, 1
      %s27 = scalar_select %p24, %s25, %s26
      %p30 = pneg %p24
      %p31 = scmp.eq.s32.totalorder %s15, 1
      %p32 = por %p30, %p31
      %p33 = scmp.ne.s32.totalorder %s25, %s28
      %p34 = scmp.eq.s32.totalorder %s15, 0
      %p35 = por %p33, %p34
      %p36 = scmp.ne.s32.totalorder %s25, %s28
      %p37 = scmp.eq.s32.totalorder %s20, 1
      %p38 = por %p36, %p37
      %p39 = scmp.ne.s32.totalorder %s28, %s29
      %p40 = scmp.eq.s32.totalorder %s20, 0
      %p41 = por %p39, %p40
      %p42 = scmp.ne.s32.totalorder %s28, %s29
      %p43 = scmp.eq.s32.totalorder %s21, 1
      %p44 = por %p42, %p43
      %p46 = scmp.ne.s32.totalorder %s29, %s45
      %p47 = scmp.eq.s32.totalorder %s21, 0
      %p48 = por %p46, %p47
      %s50 = sadd.s32 %s49, 1
      %p53 = scmp.eq.s32.totalorder %s15, 1
      %p54 = scmp.ne.s32.totalorder %s49, %s51
      %p55 = scmp.eq.s32.totalorder %s15, 0
      %p56 = por %p54, %p55
      %p57 = scmp.ne.s32.totalorder %s49, %s51
      %p58 = scmp.eq.s32.totalorder %s20, 1
      %p59 = por %p57, %p58
      %p60 = scmp.ne.s32.totalorder %s51, %s52
      %p61 = scmp.eq.s32.totalorder %s20, 0
      %p62 = por %p60, %p61
      %p63 = scmp.ne.s32.totalorder %s51, %s52
      %p64 = scmp.eq.s32.totalorder %s21, 1
      %p65 = por %p63, %p64
      %p67 = scmp.ne.s32.totalorder %s52, %s66
      %p68 = scmp.eq.s32.totalorder %s21, 0
      %p69 = por %p67, %p68
      %s71 = sadd.s32 %s70, 1
      %p74 = scmp.eq.s32.totalorder %s15, 1
      %p75 = scmp.ne.s32.totalorder %s70, %s72
      %p76 = scmp.eq.s32.totalorder %s15, 0
      %p77 = por %p75, %p76
      %p78 = scmp.ne.s32.totalorder %s70, %s72
      %p79 = scmp.eq.s32.totalorder %s20, 1
      %p80 = por %p78, %p79
      %p81 = scmp.ne.s32.totalorder %s72, %s73
      %p82 = scmp.eq.s32.totalorder %s20, 0
      %p83 = por %p81, %p82
      %p84 = scmp.ne.s32.totalorder %s72, %s73
      %p85 = scmp.eq.s32.totalorder %s21, 1
      %p86 = por %p84, %p85
      %p88 = scmp.ne.s32.totalorder %s73, %s87
      %p89 = scmp.eq.s32.totalorder %s21, 0
      %p90 = por %p88, %p89
      %s92 = sadd.s32 %s91, 1
      %p95 = scmp.eq.s32.totalorder %s15, 1
      %p96 = scmp.ne.s32.totalorder %s91, %s93
      %p97 = scmp.eq.s32.totalorder %s15, 0
      %p98 = por %p96, %p97
      %p99 = scmp.ne.s32.totalorder %s91, %s93
      %p100 = scmp.eq.s32.totalorder %s20, 1
      %p101 = por %p99, %p100
      %p102 = scmp.ne.s32.totalorder %s93, %s94
      %p103 = scmp.eq.s32.totalorder %s20, 0
      %p104 = por %p102, %p103
      %p105 = scmp.ne.s32.totalorder %s93, %s94
      %p106 = scmp.eq.s32.totalorder %s21, 1
      %p107 = por %p105, %p106
      %p109 = scmp.ne.s32.totalorder %s94, %s108
      %p110 = scmp.eq.s32.totalorder %s21, 0
      %p111 = por %p109, %p110
      %s113 = sadd.s32 %s112, 1
      %p116 = scmp.eq.s32.totalorder %s15, 1
      %p117 = scmp.ne.s32.totalorder %s112, %s114
      %p118 = scmp.eq.s32.totalorder %s15, 0
      %p119 = por %p117, %p118
      %p120 = scmp.ne.s32.totalorder %s112, %s114
      %p121 = scmp.eq.s32.totalorder %s20, 1
      %p122 = por %p120, %p121
      %p123 = scmp.ne.s32.totalorder %s114, %s115
      %p124 = scmp.eq.s32.totalorder %s20, 0
      %p125 = por %p123, %p124
      %p126 = scmp.ne.s32.totalorder %s114, %s115
      %p127 = scmp.eq.s32.totalorder %s21, 1
      %p128 = por %p126, %p127
      %p130 = scmp.ne.s32.totalorder %s115, %s129
      %p131 = scmp.eq.s32.totalorder %s21, 0
      %p132 = por %p130, %p131
      %s133 = ssub.s32 %s15, %s22
      %p134 = scmp.eq.s32.totalorder %s133, 0
      %s136 = sadd.s32 %s135, 1
      %s137 = scalar_select %p134, %s135, %s136
      %p140 = pneg %p134
      %p141 = scmp.eq.s32.totalorder %s15, 1
      %p142 = por %p140, %p141
      %p143 = scmp.ne.s32.totalorder %s135, %s138
      %p144 = scmp.eq.s32.totalorder %s15, 0
      %p145 = por %p143, %p144
      %p146 = scmp.ne.s32.totalorder %s135, %s138
      %p147 = scmp.eq.s32.totalorder %s20, 1
      %p148 = por %p146, %p147
      %p149 = scmp.ne.s32.totalorder %s138, %s139
      %p150 = scmp.eq.s32.totalorder %s20, 0
      %p151 = por %p149, %p150
      %p152 = scmp.ne.s32.totalorder %s138, %s139
      %p153 = scmp.eq.s32.totalorder %s21, 1
      %p154 = por %p152, %p153
      %p156 = scmp.ne.s32.totalorder %s139, %s155
      %p157 = scmp.eq.s32.totalorder %s21, 0
      %p158 = por %p156, %p157
      %p159 = scmp.le.s32.totalorder 1, %s15
      %p160 = scmp.lt.s32.totalorder %s15, 3
      %p161 = pnand %p159, %p160
      %p162 = pneg %p161
      // Predicated region
      $region9: #{tpu_custom_call.1} parent=5 // pred_check
        _
      $region10: #{tpu_custom_call.1} parent=5 // pred_check_branch
        %164 = sbr.rel (%p161) target = $region12
      $region11: #{tpu_custom_call.1} parent=5 // pred_region
        %s165 = ssub.s32 %s15, 1
        // Predicated region
        $region13: #{tpu_custom_call.1} parent=11 // pred_check
          %p166 = pneg %p62
        $region14: #{tpu_custom_call.1} parent=11 // pred_check_branch
          %168 = sbr.rel (%p166) target = $region16
        $region15: #{tpu_custom_call.1} parent=11 // pred_region
          %170 = vsyncadd [#allocation5], 0
          %s171 = sshll.u32 %s1, 4
          %s172 = int_to_ptr.hbm [resolvable:$true] %s171
          %s173 = sshll.u32 [#allocation4], 4
          %s174 = int_to_ptr.vmem [resolvable:$true] %s173
          %179 = dma.hbm_to_vmem [thread:$0]  %s172, 2048, %s174, [#allocation5], 128, 128, 8
        $region16: #{tpu_custom_call.1} parent=11 // pred_fallthru
          _
        // Predicated region
        $region17: #{tpu_custom_call.1} parent=11 // pred_check
          %p180 = pneg %p83
        $region18: #{tpu_custom_call.1} parent=11 // pred_check_branch
          %182 = sbr.rel (%p180) target = $region20
        $region19: #{tpu_custom_call.1} parent=11 // pred_region
          _
        $region20: #{tpu_custom_call.1} parent=11 // pred_fallthru
          _
        // Predicated region
        $region21: #{tpu_custom_call.1} parent=11 // pred_check
          %p183 = pneg %p104
        $region22: #{tpu_custom_call.1} parent=11 // pred_check_branch
          %185 = sbr.rel (%p183) target = $region24
        $region23: #{tpu_custom_call.1} parent=11 // pred_region
          %187 = vsyncadd [#allocation5], 0
          %s188 = sshll.u32 %s3, 4
          %s189 = int_to_ptr.hbm [resolvable:$true] %s188
          %s190 = sshll.u32 [#allocation6], 4
          %s191 = int_to_ptr.vmem [resolvable:$true] %s190
          %196 = dma.hbm_to_vmem [thread:$0]  %s189, 2048, %s191, [#allocation5], 128, 128, 8
        $region24: #{tpu_custom_call.1} parent=11 // pred_fallthru
          _
        // Predicated region
        $region25: #{tpu_custom_call.1} parent=11 // pred_check
          %p197 = pneg %p125
        $region26: #{tpu_custom_call.1} parent=11 // pred_check_branch
          %199 = sbr.rel (%p197) target = $region28
        $region27: #{tpu_custom_call.1} parent=11 // pred_region
          _
        $region28: #{tpu_custom_call.1} parent=11 // pred_fallthru
          _
      $region12: #{tpu_custom_call.1} parent=5 // pred_fallthru
        _
      %p200 = scmp.lt.s32.totalorder %s15, 2
      // Predicated region
      $region29: #{tpu_custom_call.1} parent=5 // pred_check
        %p201 = pneg %p200
      $region30: #{tpu_custom_call.1} parent=5 // pred_check_branch
        %203 = sbr.rel (%p201) target = $region32
      $region31: #{tpu_custom_call.1} parent=5 // pred_region
        // Predicated region
        $region33: #{tpu_custom_call.1} parent=31 // pred_check
          %p204 = pneg %p35
        $region34: #{tpu_custom_call.1} parent=31 // pred_check_branch
          %206 = sbr.rel (%p204) target = $region36
        $region35: #{tpu_custom_call.1} parent=31 // pred_region
          %s207 = sand.u32 %s25, 1
          %s208 = scalar_lea.sflag [#allocation3], %s207
          %s209 = sand.u32 %s25, 1
          %s210 = smul.addr %s209, 8
          %s211 = scalar_lea.vmem [#allocation2], %s210
          %213 = vsyncadd %s208, 0
          %s214 = smul.addr %s15, 8
          %s215 = smul.addr %s214, 8
          %s216 = scalar_lea.hbm %s0, %s215
          %s218 = sshll.u32 %s216, 4
          %s219 = int_to_ptr.hbm [resolvable:$true] %s218
          %s220 = sshll.u32 %s211, 4
          %s221 = int_to_ptr.vmem [resolvable:$true] %s220
          %223 = dma.hbm_to_vmem [thread:$0]  %s219, 128, %s221, %s208
        $region36: #{tpu_custom_call.1} parent=31 // pred_fallthru
          _
      $region32: #{tpu_custom_call.1} parent=5 // pred_fallthru
        _
      %p224 = scmp.le.s32.totalorder 1, %s15
      %p225 = scmp.lt.s32.totalorder %s15, 3
      %p226 = pnand %p224, %p225
      %p227 = pneg %p226
      // Predicated region
      $region37: #{tpu_custom_call.1} parent=5 // pred_check
        _
      $region38: #{tpu_custom_call.1} parent=5 // pred_check_branch
        %229 = sbr.rel (%p226) target = $region40
      $region39: #{tpu_custom_call.1} parent=5 // pred_region
        %s230 = ssub.s32 %s15, 1
        %s231 = sand.u32 %s28, 1
        %s232 = scalar_lea.sflag [#allocation3], %s231
        %s233 = sand.u32 %s28, 1
        %s234 = smul.addr %s233, 8
        %s235 = scalar_lea.vmem [#allocation2], %s234
        // Predicated region
        $region41: #{tpu_custom_call.1} parent=39 // pred_check
          %p236 = pneg %p41
        $region42: #{tpu_custom_call.1} parent=39 // pred_check_branch
          %238 = sbr.rel (%p236) target = $region44
        $region43: #{tpu_custom_call.1} parent=39 // pred_region
          %240 = dma.done %s232, 128
        $region44: #{tpu_custom_call.1} parent=39 // pred_fallthru
          _
        // Predicated region
        $region45: #{tpu_custom_call.1} parent=39 // pred_check
          %p241 = pneg %p62
        $region46: #{tpu_custom_call.1} parent=39 // pred_check_branch
          %243 = sbr.rel (%p241) target = $region48
        $region47: #{tpu_custom_call.1} parent=39 // pred_region
          %245 = dma.done [#allocation5], 2048
        $region48: #{tpu_custom_call.1} parent=39 // pred_fallthru
          _
        // Predicated region
        $region49: #{tpu_custom_call.1} parent=39 // pred_check
          %p246 = pneg %p104
        $region50: #{tpu_custom_call.1} parent=39 // pred_check_branch
          %248 = sbr.rel (%p246) target = $region52
        $region51: #{tpu_custom_call.1} parent=39 // pred_region
          %250 = dma.done [#allocation5], 2048
        $region52: #{tpu_custom_call.1} parent=39 // pred_fallthru
          _
        %s251 = sand.u32 %s28, 1
        %s252 = scalar_lea.sflag [#allocation3], %s251
        %s253 = sand.u32 %s28, 1
        %s254 = smul.addr %s253, 8
        %s255 = scalar_lea.vmem [#allocation2], %s254
        %p256 = pneg %p41
        %p257 = pneg %p38
        %p258 = pneg %p62
        %p259 = pneg %p59
        %p260 = pneg %p83
        %p261 = pneg %p80
        %p262 = pneg %p104
        %p263 = pneg %p101
        %p264 = pneg %p125
        %p265 = pneg %p122
        %p266 = pneg %p151
        %p267 = pneg %p148
        %p268 = scmp.lt.s32.totalorder %s20, 1
        %s269 = scalar_select %p268, %s20, 1
        %s270 = smul.addr %s269, 8
        %s271 = scalar_lea.vmem %s5, %s270
        %p272 = scmp.lt.s32.totalorder %s20, 1
        %s273 = scalar_select %p272, %s20, 1
        %s274 = smul.addr %s273, 8
        %s275 = scalar_lea.vmem %s5, %s274
        %v276 = vld [vmem:[%s235] sm:$0xff]
        %v277 = vld [vmem:[#allocation4] sm:$0xff]
        %v278 = vld [vmem:[#allocation4 + $0x8] sm:$0xff]
        %v279 = vld [vmem:[#allocation4 + $0x10] sm:$0xff]
        %v280 = vld [vmem:[#allocation4 + $0x18] sm:$0xff]
        %v281 = vld [vmem:[#allocation4 + $0x20] sm:$0xff]
        %v282 = vld [vmem:[#allocation4 + $0x28] sm:$0xff]
        %v283 = vld [vmem:[#allocation4 + $0x30] sm:$0xff]
        %v284 = vld [vmem:[#allocation4 + $0x38] sm:$0xff]
        %v285 = vld [vmem:[#allocation4 + $0x40] sm:$0xff]
        %v286 = vld [vmem:[#allocation4 + $0x48] sm:$0xff]
        %v287 = vld [vmem:[#allocation4 + $0x50] sm:$0xff]
        %v288 = vld [vmem:[#allocation4 + $0x58] sm:$0xff]
        %v289 = vld [vmem:[#allocation4 + $0x60] sm:$0xff]
        %v290 = vld [vmem:[#allocation4 + $0x68] sm:$0xff]
        %v291 = vld [vmem:[#allocation4 + $0x70] sm:$0xff]
        %v292 = vld [vmem:[#allocation4 + $0x78] sm:$0xff]
        %v293 = vld [vmem:[%s2] sm:$0x1]
        %v295 = vperm.slane %v293, 0
        %297 = vmatpush.msra.mxu0 %v292
        %298 = vmatpush.msra.mxu0 %v291
        %299 = vmatpush.msra.mxu0 %v290
        %300 = vmatpush.msra.mxu0 %v289
        %301 = vmatpush.msra.mxu0 %v288
        %302 = vmatpush.msra.mxu0 %v287
        %303 = vmatpush.msra.mxu0 %v286
        %304 = vmatpush.msra.mxu0 %v285
        %305 = vmatpush.msra.mxu0 %v284
        %306 = vmatpush.msra.mxu0 %v283
        %307 = vmatpush.msra.mxu0 %v282
        %308 = vmatpush.msra.mxu0 %v281
        %309 = vmatpush.msra.mxu0 %v280
        %310 = vmatpush.msra.mxu0 %v279
        %311 = vmatpush.msra.mxu0 %v278
        %312 = vmatpush.msra.mxu0 %v277
        %313 = vmatmul.f32.gmra.mxu0 %v276
        %v314 = vpop.f32.mrf.mxu0
        %v315 = vadd.f32 %v295, %v314
        %316 = vdwg.mxu0
        %v317 = vtanh.pop %v315
        %v318 = vld [vmem:[#allocation6] sm:$0xff]
        %v319 = vld [vmem:[#allocation6 + $0x8] sm:$0xff]
        %v320 = vld [vmem:[#allocation6 + $0x10] sm:$0xff]
        %v321 = vld [vmem:[#allocation6 + $0x18] sm:$0xff]
        %v322 = vld [vmem:[#allocation6 + $0x20] sm:$0xff]
        %v323 = vld [vmem:[#allocation6 + $0x28] sm:$0xff]
        %v324 = vld [vmem:[#allocation6 + $0x30] sm:$0xff]
        %v325 = vld [vmem:[#allocation6 + $0x38] sm:$0xff]
        %v326 = vld [vmem:[#allocation6 + $0x40] sm:$0xff]
        %v327 = vld [vmem:[#allocation6 + $0x48] sm:$0xff]
        %v328 = vld [vmem:[#allocation6 + $0x50] sm:$0xff]
        %v329 = vld [vmem:[#allocation6 + $0x58] sm:$0xff]
        %v330 = vld [vmem:[#allocation6 + $0x60] sm:$0xff]
        %v331 = vld [vmem:[#allocation6 + $0x68] sm:$0xff]
        %v332 = vld [vmem:[#allocation6 + $0x70] sm:$0xff]
        %v333 = vld [vmem:[#allocation6 + $0x78] sm:$0xff]
        %v334 = vld [vmem:[%s4] sm:$0x1]
        %v336 = vperm.slane %v334, 0
        %338 = vmatpush.msra.mxu0 %v333
        %339 = vmatpush.msra.mxu0 %v332
        %340 = vmatpush.msra.mxu0 %v331
        %341 = vmatpush.msra.mxu0 %v330
        %342 = vmatpush.msra.mxu0 %v329
        %343 = vmatpush.msra.mxu0 %v328
        %344 = vmatpush.msra.mxu0 %v327
        %345 = vmatpush.msra.mxu0 %v326
        %346 = vmatpush.msra.mxu0 %v325
        %347 = vmatpush.msra.mxu0 %v324
        %348 = vmatpush.msra.mxu0 %v323
        %349 = vmatpush.msra.mxu0 %v322
        %350 = vmatpush.msra.mxu0 %v321
        %351 = vmatpush.msra.mxu0 %v320
        %352 = vmatpush.msra.mxu0 %v319
        %353 = vmatpush.msra.mxu0 %v318
        %354 = vmatmul.f32.gmra.mxu0 %v317
        %v355 = vpop.f32.mrf.mxu0
        %v356 = vadd.f32 %v336, %v355
        %357 = vdwg.mxu0
        %vm358 = vcmask 15360
        %359 = vst.msk [vmem:[%s275] sm:$0xff] %vm358, %v356
        %p360 = scmp.lt.s32.totalorder %s20, 1
        %s361 = scalar_select %p360, %s20, 1
        %s362 = smul.addr %s361, 8
        %s363 = scalar_lea.vmem %s5, %s362
        // Predicated region
        $region53: #{tpu_custom_call.1} parent=39 // pred_check
          %p364 = pneg %p148
        $region54: #{tpu_custom_call.1} parent=39 // pred_check_branch
          %366 = sbr.rel (%p364) target = $region56
        $region55: #{tpu_custom_call.1} parent=39 // pred_region
          _
        $region56: #{tpu_custom_call.1} parent=39 // pred_fallthru
          _
      $region40: #{tpu_custom_call.1} parent=5 // pred_fallthru
        _
      %p367 = scmp.le.s32.totalorder 2, %s15
      // Predicated region
      $region57: #{tpu_custom_call.1} parent=5 // pred_check
        %p368 = pneg %p367
      $region58: #{tpu_custom_call.1} parent=5 // pred_check_branch
        %370 = sbr.rel (%p368) target = $region60
      $region59: #{tpu_custom_call.1} parent=5 // pred_region
        %s371 = ssub.s32 %s15, 2
        // Predicated region
        $region61: #{tpu_custom_call.1} parent=59 // pred_check
          %p372 = pneg %p154
        $region62: #{tpu_custom_call.1} parent=59 // pred_check_branch
          %374 = sbr.rel (%p372) target = $region64
        $region63: #{tpu_custom_call.1} parent=59 // pred_region
          %p375 = scmp.lt.s32.totalorder %s21, 1
          %s376 = scalar_select %p375, %s21, 1
          %s377 = smul.addr %s376, 8
          %s378 = scalar_lea.vmem %s5, %s377
        $region64: #{tpu_custom_call.1} parent=59 // pred_fallthru
          _
      $region60: #{tpu_custom_call.1} parent=5 // pred_fallthru
        _
    $region6: #{tpu_custom_call.1} parent=1 // loop_footer
      %s19 = sadd.s32 1, %s15
    $region7: #{tpu_custom_call.1} parent=1 // loop_footer_branch
      %14 = sbr.rel target = $region3
    $region8: #{tpu_custom_call.1} parent=1 // loop_exit
      _
    %379 = vsyncpa [#allocation3], 1
    %s380 = scalar_lea.sflag [#allocation3], 1
    %381 = vsyncpa %s380, 1
    %382 = vsyncpa [#allocation5], 1

</llo_original>
